<compile_context>
chip_gen: v7x
topology: tpu7x:2x2x1
jax: 0.10.0
libtpu: 0.0.40
codegen_flags: <defaults>
</compile_context>

<pallas_src>
import jax
import jax.numpy as jnp
from jax import lax
from jax.experimental import pallas as pl
from jax.experimental.pallas import tpu as pltpu


def _round_up(x, m):
    return (x + m - 1) // m * m


def _patch_embed_kernel(p_ref, w_ref, b_ref, o_ref):
    # p_ref: (tm, K)  bf16 patch tile, streamed along the M grid axis
    # w_ref: (K, N)   bf16 flattened conv weight; constant block index -> resident in VMEM
    # b_ref: (1, N)   f32 bias; resident
    # o_ref: (tm, N)  bf16 output tile (lane-dense: N is a multiple of 128)
    acc = jnp.dot(p_ref[...], w_ref[...], preferred_element_type=jnp.float32)
    o_ref[...] = (acc + b_ref[...]).astype(o_ref.dtype)


def patch_embed_matmul(patches, w_flat_t, bias, *, out_dtype=jnp.bfloat16):
    """patches: [M, K] bf16, w_flat_t: [K, E] bf16, bias: [E] f32 -> [M, E] out_dtype."""
    M, K = patches.shape
    _, E = w_flat_t.shape

    # Lane-align K and N.  Zero-padded columns/rows don't change the result and the pads are
    # weight-sized (cheap); padded bias columns stay zero and are sliced off below.
    Kp = _round_up(K, 128)
    Np = _round_up(E, 128)
    if Kp != K:
        patches = jnp.pad(patches, ((0, 0), (0, Kp - K)))
        w_flat_t = jnp.pad(w_flat_t, ((0, Kp - K), (0, 0)))
    if Np != E:
        w_flat_t = jnp.pad(w_flat_t, ((0, 0), (0, Np - E)))
        bias = jnp.pad(bias, (0, Np - E))
    bias2d = bias.astype(jnp.float32).reshape(1, Np)

    # M tile selection: big tiles amortize the ~0.35 us per-step overhead; always >= 2 grid steps
    # so the parallel M axis can split across both v7x TensorCores.  Multiples of 256 give full
    # MXU passes on v6e/v7x; small problems use a multiple of 16 (full bf16 sublane packing).
    if M >= 4096:
        tm = 1024
    elif M >= 1024:
        tm = 512
    elif M >= 512:
        tm = 256
    else:
        tm = max(16, _round_up(pl.cdiv(M, 2), 16))

    grid = (pl.cdiv(M, tm),)
    m_eff = grid[0] * tm  # rows actually streamed through the pipeline

    out_itemsize = jnp.dtype(out_dtype).itemsize
    cost = pl.CostEstimate(
        flops=2 * m_eff * Kp * Np,
        transcendentals=0,
        bytes_accessed=(
            m_eff * Kp * patches.dtype.itemsize   # streamed bf16 patches
            + Kp * Np * w_flat_t.dtype.itemsize   # resident bf16 weight
            + Np * 4                              # f32 bias
            + m_eff * Np * out_itemsize           # bf16 output writeback
        ),
    )

    out = pl.pallas_call(
        _patch_embed_kernel,
        out_shape=jax.ShapeDtypeStruct((M, Np), out_dtype),
        grid_spec=pltpu.PrefetchScalarGridSpec(
            num_scalar_prefetch=0,
            grid=grid,
            in_specs=[
                pl.BlockSpec((tm, Kp), lambda i: (i, 0)),   # streamed patches
                pl.BlockSpec((Kp, Np), lambda i: (0, 0)),   # resident weight
                pl.BlockSpec((1, Np), lambda i: (0, 0)),    # resident bias
            ],
            out_specs=pl.BlockSpec((tm, Np), lambda i: (i, 0)),
        ),
        compiler_params=pltpu.CompilerParams(
            dimension_semantics=("parallel",),
            # 32 MiB scoped VMEM: safe on v7x (64 MiB physical) and well above the footprint
            # (2*tm*Kp bf16 + 2*tm*Np bf16 + 2*Kp*Np bf16 ~ 10 MiB at tm=1024, K=N=768).
            vmem_limit_bytes=32 * 1024 * 1024,
            # Let XLA fold the bf16 NCHW -> patch-matrix rearrange/pad into the input DMA of the
            # patches operand instead of materializing it as a standalone pass (best-effort).
            allow_input_fusion=[True, False, False],
        ),
        cost_estimate=cost,
    )(patches, w_flat_t, bias2d)

    return out[:, :E]


def patch_embed_forward(x, conv_w, conv_b, patch_size, *,
                        compute_dtype=jnp.bfloat16, out_dtype=jnp.bfloat16,
                        channels_last=False):
    """x: [B, C, H, W]; conv_w: [E, C, P, P]; conv_b: [E] or None.

    Returns NCHW [B, E, H//P, W//P] (like the PyTorch module), or channel-last tokens
    [B, H//P, W//P, E] when channels_last=True (skips the trailing transpose pass).
    """
    B, C, H, W = x.shape
    E = conv_w.shape[0]
    P = patch_size
    nH, nW = H // P, W // P

    # bf16 for the MXU; the rearrange below moves half the bytes and is fusible into the
    # pallas_call patches operand (allow_input_fusion above).
    x = x.astype(compute_dtype)
    xp = x.reshape(B, C, nH, P, nW, P)
    xp = jnp.transpose(xp, (0, 2, 4, 1, 3, 5))            # [B, nH, nW, C, P, P]
    patches = xp.reshape(B * nH * nW, C * P * P)

    # Conv weight -> linear projection matrix [C*P*P, E] (same (C,P,P) flattening order).
    w_flat_t = conv_w.reshape(E, C * P * P).T.astype(compute_dtype)
    if conv_b is None:   # no_patch_embed_bias=True variant of the module
        conv_b = jnp.zeros((E,), jnp.float32)

    tokens = patch_embed_matmul(patches, w_flat_t, conv_b.astype(jnp.float32),
                                out_dtype=out_dtype)       # [B*nH*nW, E]
    tokens = tokens.reshape(B, nH, nW, E)
    if channels_last:
        return tokens                                      # [B, nH, nW, E], no extra pass
    return jnp.transpose(tokens, (0, 3, 1, 2))             # NCHW: [B, E, nH, nW] (bf16 transpose)


if __name__ == "__main__":
    # Small shapes consistent with the module: img=16, patch=4, C=4, E=32, B=2.
    B, C, H, W = 2, 4, 16, 16
    P = 4
    E = 32

    key = jax.random.PRNGKey(0)
    kx, kw, kb = jax.random.split(key, 3)
    x = jax.random.normal(kx, (B, C, H, W), dtype=jnp.float32)
    conv_w = jax.random.normal(kw, (E, C, P, P), dtype=jnp.float32) * 0.02
    conv_b = jax.random.normal(kb, (E,), dtype=jnp.float32) * 0.02

    out = jax.jit(lambda a, w, b: patch_embed_forward(a, w, b, P))(x, conv_w, conv_b)
    out = jax.block_until_ready(out)
    assert out.shape == (B, E, H // P, W // P), out.shape

    # Reference: XLA conv (PyTorch Conv2d semantics, NCHW/OIHW) with operands rounded to bf16
    # (same operand precision as the kernel's MXU path), f32 accumulation.  The kernel stores
    # bf16 output, so tolerances account for one extra output-rounding step.
    x_bf = x.astype(jnp.bfloat16).astype(jnp.float32)
    w_bf = conv_w.astype(jnp.bfloat16).astype(jnp.float32)
    ref = lax.conv_general_dilated(
        x_bf, w_bf, window_strides=(P, P), padding="VALID",
        dimension_numbers=("NCHW", "OIHW", "NCHW")) + conv_b.reshape(1, E, 1, 1)
    ref = jax.block_until_ready(ref)

    out_f32 = out.astype(jnp.float32)
    err = float(jnp.max(jnp.abs(out_f32 - ref)))
    assert jnp.allclose(out_f32, ref, atol=1e-2, rtol=1e-2), err

    print("KERNEL_OK")
</pallas_src>

<mosaic_0001>
module attributes {stable_mosaic.version = 11 : i64} {
  func.func @_patch_embed_kernel(%arg0: i32, %arg1: memref<16x128xbf16, #tpu.memory_space<vmem>>, %arg2: memref<128x128xbf16, #tpu.memory_space<vmem>>, %arg3: memref<1x128xf32, #tpu.memory_space<vmem>>, %arg4: memref<16x128xbf16, #tpu.memory_space<vmem>>) attributes {dimension_semantics = [#tpu.dimension_semantics<parallel>], iteration_bounds = array<i64: 2>, scalar_prefetch = 0 : i64, scratch_operands = 0 : i64, tpu.core_type = #tpu.core_type<tc>, window_params = [{transform_indices = @transform_0, window_bounds = array<i64: 16, 128>}, {pipeline_mode = #tpu.pipeline_mode<synchronous>, transform_indices = @transform_1, window_bounds = array<i64: 128, 128>}, {pipeline_mode = #tpu.pipeline_mode<synchronous>, transform_indices = @transform_2, window_bounds = array<i64: 1, 128>}, {transform_indices = @transform_3, window_bounds = array<i64: 16, 128>}]} {
    %c0 = arith.constant 0 : index
    %c0_0 = arith.constant 0 : index
    %0 = vector.load %arg1[%c0, %c0_0] : memref<16x128xbf16, #tpu.memory_space<vmem>>, vector<16x128xbf16>
    %c0_1 = arith.constant 0 : index
    %c0_2 = arith.constant 0 : index
    %1 = vector.load %arg2[%c0_1, %c0_2] : memref<128x128xbf16, #tpu.memory_space<vmem>>, vector<128x128xbf16>
    %cst = arith.constant dense<0.000000e+00> : vector<16x128xf32>
    %2 = tpu.matmul %0, %1, %cst {dimension_numbers = #tpu.dot_dimension_numbers<[1], [0], [0], [1], [0, 0, 1, 1], [], []>} : vector<16x128xbf16>, vector<128x128xbf16>, vector<16x128xf32> -> vector<16x128xf32>
    %c0_3 = arith.constant 0 : index
    %c0_4 = arith.constant 0 : index
    %3 = vector.load %arg3[%c0_3, %c0_4] : memref<1x128xf32, #tpu.memory_space<vmem>>, vector<1x128xf32>
    %4 = vector.broadcast %3 : vector<1x128xf32> to vector<16x128xf32>
    %5 = arith.addf %2, %4 : vector<16x128xf32>
    %6 = arith.truncf %5 : vector<16x128xf32> to vector<16x128xbf16>
    %c0_5 = arith.constant 0 : index
    %c0_6 = arith.constant 0 : index
    %7 = vector.load %arg4[%c0_5, %c0_6] : memref<16x128xbf16, #tpu.memory_space<vmem>>, vector<16x128xbf16>
    tpu.vector_store %arg4[%c0_5, %c0_6], %6 {strides = array<i32>} : memref<16x128xbf16, #tpu.memory_space<vmem>>, vector<16x128xbf16>,
    return
  }
  func.func @transform_0(%arg0: i32) -> (i32, i32) {
    %c0_i32 = arith.constant 0 : i32
    %c0_i32_0 = arith.constant 0 : i32
    return %arg0, %c0_i32 : i32, i32
  }
  func.func @transform_1(%arg0: i32) -> (i32, i32) {
    %c0_i32 = arith.constant 0 : i32
    %c0_i32_0 = arith.constant 0 : i32
    %c0_i32_1 = arith.constant 0 : i32
    return %c0_i32, %c0_i32_0 : i32, i32
  }
  func.func @transform_2(%arg0: i32) -> (i32, i32) {
    %c0_i32 = arith.constant 0 : i32
    %c0_i32_0 = arith.constant 0 : i32
    %c0_i32_1 = arith.constant 0 : i32
    return %c0_i32, %c0_i32_0 : i32, i32
  }
  func.func @transform_3(%arg0: i32) -> (i32, i32) {
    %c0_i32 = arith.constant 0 : i32
    %c0_i32_0 = arith.constant 0 : i32
    return %arg0, %c0_i32 : i32, i32
  }
}

</mosaic_0001>

<llo_original>
// kernel: _lambda_.2
$region0: #{_lambda_.2}
  #allocation0 [shape = 'u32[]', space=smem, size = 0x4, offset = 0x4, fixed_abs, tag = 'smem constant byte address 0x4 - core index']
  #allocation1 [shape = 'u32[144,128]{1,0:T(1,128)}', space=vmem, size = 0x12000, scoped, tag = 'internal scratch']
  #allocation2 [shape = 'u32[2048]{0}', space=vmem, size = 0x2000, scoped, tag = 'scoped memory for _lambda_.2']
  #allocation3 [shape = 'u32[2048]{0}', space=vmem, size = 0x2000, scoped, tag = 'scoped memory for _lambda_.2']
  #allocation4 [shape = 'u32[2048]{0}', space=vmem, size = 0x2000, scoped, tag = 'scoped memory for _lambda_.2']
  #allocation5 [shape = 'u32[2048]{0}', space=vmem, size = 0x2000, scoped, tag = 'scoped memory for _lambda_.2']
  #allocation6 [shape = 'u32[2048]{0}', space=vmem, size = 0x2000, scoped, tag = 'scoped memory for _lambda_.2']
  %s0 = inlined_call_operand.vmem [shape: bf16[128,128], index: 0, kind: input, shape index: {}]
  %s1 = inlined_call_operand.vmem [shape: f32[1,128], index: 1, kind: input, shape index: {}]
  %s2 = inlined_call_operand.vmem [shape: bf16[32,64], index: 2, kind: input, shape index: {}]
  %s3 = inlined_call_operand.<no memory space> [shape: bf16[], index: 3, kind: input, shape index: {}]
  %s4 = inlined_call_operand.hbm [shape: bf16[32,128], index: 4, kind: output, shape index: {}]
  %s5 = sld [smem:[#allocation0]]
  $region45: #{_lambda_.2} parent=0
    _
  %s7 = ssub.s32 1, %s5
  %s8 = scalar_select 0, %s7, %s5
  %v9 = vstv %s3
  %v10 = vunpack.i.l.bf16 %v9
  %v12 = vunpack.i.h.bf16 %v9
  $region1: #{_lambda_.2} parent=0
    #allocation7 [shape = 'u8[8192]{0}', space=vmem, size = 0x2000, scoped, tag = 'output window, operand 0']
    #allocation8 [shape = 's32[2]{0}', space=sflag, size = 0x8, scoped, tag = 'scoped memory for _lambda_.2']
    %14 = vsyncpa [#allocation8], 0
    %s15 = scalar_lea.sflag [#allocation8], 1
    %16 = vsyncpa %s15, 0
    loop: start=0, step=1, limit=4
    $region2: #{_lambda_.2} parent=1 // loop_pre_header
      _
    $region3: #{_lambda_.2} parent=1 // loop_header
      %s18 = sphi 0, %s22
      %p19 = scmp.ge.s32.totalorder %s18, 4
      %s28 = sphi 0, %s30
      %s31 = sphi 0, %s28
      %s32 = sphi 0, %s31
      %s48 = sphi 0, %s32
      %s52 = sphi 0, %s52
      %s54 = sphi 0, %s52
      %s55 = sphi 0, %s54
      %s69 = sphi 0, %s55
      %s73 = sphi 0, %s73
      %s75 = sphi 0, %s73
      %s76 = sphi 0, %s75
      %s90 = sphi 0, %s76
      %s96 = sphi 0, %s98
      %s99 = sphi 0, %s96
      %s100 = sphi 0, %s99
      %s116 = sphi 0, %s100
    $region4: #{_lambda_.2} parent=1 // loop_header_branch
      %21 = sbr.rel (%p19) target = $region8
    $region5: #{_lambda_.2} parent=1 // loop_body
      %s23 = ssub.s32 %s18, 1
      %s24 = ssub.s32 %s18, 2
      %s25 = sadd.s32 %s18, 1
      %s26 = ssub.s32 %s18, %s25
      %p27 = scmp.eq.s32.totalorder %s26, 0
      %s29 = sadd.s32 %s28, 1
      %s30 = scalar_select %p27, %s28, %s29
      %p33 = pneg %p27
      %p34 = scmp.eq.s32.totalorder %s18, 1
      %p35 = por %p33, %p34
      %p36 = scmp.ne.s32.totalorder %s28, %s31
      %p37 = scmp.eq.s32.totalorder %s18, 0
      %p38 = por %p36, %p37
      %p39 = scmp.ne.s32.totalorder %s28, %s31
      %p40 = scmp.eq.s32.totalorder %s23, 1
      %p41 = por %p39, %p40
      %p42 = scmp.ne.s32.totalorder %s31, %s32
      %p43 = scmp.eq.s32.totalorder %s23, 0
      %p44 = por %p42, %p43
      %p45 = scmp.ne.s32.totalorder %s31, %s32
      %p46 = scmp.eq.s32.totalorder %s24, 1
      %p47 = por %p45, %p46
      %p49 = scmp.ne.s32.totalorder %s32, %s48
      %p50 = scmp.eq.s32.totalorder %s24, 0
      %p51 = por %p49, %p50
      %s53 = sadd.s32 %s52, 1
      %p56 = scmp.eq.s32.totalorder %s18, 1
      %p57 = scmp.ne.s32.totalorder %s52, %s54
      %p58 = scmp.eq.s32.totalorder %s18, 0
      %p59 = por %p57, %p58
      %p60 = scmp.ne.s32.totalorder %s52, %s54
      %p61 = scmp.eq.s32.totalorder %s23, 1
      %p62 = por %p60, %p61
      %p63 = scmp.ne.s32.totalorder %s54, %s55
      %p64 = scmp.eq.s32.totalorder %s23, 0
      %p65 = por %p63, %p64
      %p66 = scmp.ne.s32.totalorder %s54, %s55
      %p67 = scmp.eq.s32.totalorder %s24, 1
      %p68 = por %p66, %p67
      %p70 = scmp.ne.s32.totalorder %s55, %s69
      %p71 = scmp.eq.s32.totalorder %s24, 0
      %p72 = por %p70, %p71
      %s74 = sadd.s32 %s73, 1
      %p77 = scmp.eq.s32.totalorder %s18, 1
      %p78 = scmp.ne.s32.totalorder %s73, %s75
      %p79 = scmp.eq.s32.totalorder %s18, 0
      %p80 = por %p78, %p79
      %p81 = scmp.ne.s32.totalorder %s73, %s75
      %p82 = scmp.eq.s32.totalorder %s23, 1
      %p83 = por %p81, %p82
      %p84 = scmp.ne.s32.totalorder %s75, %s76
      %p85 = scmp.eq.s32.totalorder %s23, 0
      %p86 = por %p84, %p85
      %p87 = scmp.ne.s32.totalorder %s75, %s76
      %p88 = scmp.eq.s32.totalorder %s24, 1
      %p89 = por %p87, %p88
      %p91 = scmp.ne.s32.totalorder %s76, %s90
      %p92 = scmp.eq.s32.totalorder %s24, 0
      %p93 = por %p91, %p92
      %s94 = ssub.s32 %s18, %s25
      %p95 = scmp.eq.s32.totalorder %s94, 0
      %s97 = sadd.s32 %s96, 1
      %s98 = scalar_select %p95, %s96, %s97
      %p101 = pneg %p95
      %p102 = scmp.eq.s32.totalorder %s18, 1
      %p103 = por %p101, %p102
      %p104 = scmp.ne.s32.totalorder %s96, %s99
      %p105 = scmp.eq.s32.totalorder %s18, 0
      %p106 = por %p104, %p105
      %p107 = scmp.ne.s32.totalorder %s96, %s99
      %p108 = scmp.eq.s32.totalorder %s23, 1
      %p109 = por %p107, %p108
      %p110 = scmp.ne.s32.totalorder %s99, %s100
      %p111 = scmp.eq.s32.totalorder %s23, 0
      %p112 = por %p110, %p111
      %p113 = scmp.ne.s32.totalorder %s99, %s100
      %p114 = scmp.eq.s32.totalorder %s24, 1
      %p115 = por %p113, %p114
      %p117 = scmp.ne.s32.totalorder %s100, %s116
      %p118 = scmp.eq.s32.totalorder %s24, 0
      %p119 = por %p117, %p118
      %p120 = scmp.le.s32.totalorder 1, %s18
      %p121 = scmp.lt.s32.totalorder %s18, 3
      %p122 = pnand %p120, %p121
      %p123 = pneg %p122
      // Predicated region
      $region9: #{_lambda_.2} parent=5 // pred_check
        _
      $region10: #{_lambda_.2} parent=5 // pred_check_branch
        %125 = sbr.rel (%p122) target = $region12
      $region11: #{_lambda_.2} parent=5 // pred_region
        %s126 = ssub.s32 %s18, 1
        // Predicated region
        $region13: #{_lambda_.2} parent=11 // pred_check
          %p127 = pneg %p65
        $region14: #{_lambda_.2} parent=11 // pred_check_branch
          %129 = sbr.rel (%p127) target = $region16
        $region15: #{_lambda_.2} parent=11 // pred_region
          _
        $region16: #{_lambda_.2} parent=11 // pred_fallthru
          _
        // Predicated region
        $region17: #{_lambda_.2} parent=11 // pred_check
          %p130 = pneg %p86
        $region18: #{_lambda_.2} parent=11 // pred_check_branch
          %132 = sbr.rel (%p130) target = $region20
        $region19: #{_lambda_.2} parent=11 // pred_region
          _
        $region20: #{_lambda_.2} parent=11 // pred_fallthru
          _
      $region12: #{_lambda_.2} parent=5 // pred_fallthru
        _
      %p133 = scmp.lt.s32.totalorder %s18, 2
      // Predicated region
      $region21: #{_lambda_.2} parent=5 // pred_check
        %p134 = pneg %p133
      $region22: #{_lambda_.2} parent=5 // pred_check_branch
        %136 = sbr.rel (%p134) target = $region24
      $region23: #{_lambda_.2} parent=5 // pred_region
        // Predicated region
        $region25: #{_lambda_.2} parent=23 // pred_check
          %p137 = pneg %p38
        $region26: #{_lambda_.2} parent=23 // pred_check_branch
          %139 = sbr.rel (%p137) target = $region28
        $region27: #{_lambda_.2} parent=23 // pred_region
          %s140 = smul.u32 2, %s18
          %p141 = scmp.lt.s32.totalorder %s140, 3
          %s142 = scalar_select %p141, %s140, 3
          %s143 = smul.addr %s142, 4
          %s144 = scalar_lea.vmem %s2, %s143
          %s145 = smul.u32 2, %s18
        $region28: #{_lambda_.2} parent=23 // pred_fallthru
          _
      $region24: #{_lambda_.2} parent=5 // pred_fallthru
        _
      %p146 = scmp.le.s32.totalorder 1, %s18
      %p147 = scmp.lt.s32.totalorder %s18, 3
      %p148 = pnand %p146, %p147
      %p149 = pneg %p148
      // Predicated region
      $region29: #{_lambda_.2} parent=5 // pred_check
        _
      $region30: #{_lambda_.2} parent=5 // pred_check_branch
        %151 = sbr.rel (%p148) target = $region32
      $region31: #{_lambda_.2} parent=5 // pred_region
        #allocation9 [shape = 'u8[4096]{0}', space=vmem, size = 0x1000, dematerialized = true, scoped, tag = 'FusionAdapter Buffer %fusion.1 = bf16[32,128]{1,0:T(8,128)(2,1)} fusion(%param_2.1, %param_3), kind=kLoop, calls=%fused_computation.2.clone, metadata={op_name="jit(<lambda>)/jit(_pad)/pad" stack_frame_id=15}']
        %s152 = ssub.s32 %s18, 1
        %s153 = smul.u32 2, %s23
        %p154 = scmp.lt.s32.totalorder %s153, 3
        %s155 = scalar_select %p154, %s153, 3
        %s156 = smul.addr %s155, 4
        %s157 = scalar_lea.vmem %s2, %s156
        %p158 = pneg %p44
        %p159 = pneg %p41
        %p160 = pneg %p65
        %p161 = pneg %p62
        %p162 = pneg %p86
        %p163 = pneg %p83
        %p164 = pneg %p112
        %p165 = pneg %p109
        %s166 = sand.u32 %s99, 1
        %s167 = scalar_lea.sflag [#allocation8], %s166
        %s168 = sand.u32 %s99, 1
        %s169 = smul.addr %s168, 8
        %s170 = scalar_lea.vmem [#allocation7], %s169
        %s171 = smul.u32 2, %s23
        %p172 = scmp.lt.s32.totalorder %s171, 3
        %s173 = scalar_select %p172, %s171, 3
        %s174 = smul.addr %s173, 4
        %s175 = scalar_lea.vmem %s2, %s174
        %s176 = smul.u32 2, %s23
        %s177 = smul.u32 2, %s23
        %s179 = sor.u32 255, 127
        %s180 = sand.u32 %s179, 85
        %s181 = sshrl.u32 %s180, 1
        %s182 = sor.u32 %s180, %s181
        %s183 = sand.u32 51, %s182
        %s184 = sshrl.u32 %s183, 2
        %s185 = sor.u32 %s183, %s184
        %s186 = sand.u32 15, %s185
        %v187 = vld [vmem:[%s175] sm:%s186]
        %v188 = vunpack.c.l.bf16 %v187
        %v189 = vunpack.c.h.bf16 %v187
        %v190 = vlaneseq
        %v191 = vand.u32 %v190, 127
        %vm193 = vcmp.lt.s32.totalorder %v191, 64
        %v194 = vsel %vm193, %v188, %v10
        %v195 = vpack.c.bf16 0.0, %v194
        %197 = vst [vmem:[#allocation9] sm:$0xf] %v195
        %s198 = scalar_lea.vmem %s175, 4
        %s200 = sor.u32 255, 127
        %s201 = sand.u32 %s200, 85
        %s202 = sshrl.u32 %s201, 1
        %s203 = sor.u32 %s201, %s202
        %s204 = sand.u32 51, %s203
        %s205 = sshrl.u32 %s204, 2
        %s206 = sor.u32 %s204, %s205
        %s207 = sand.u32 15, %s206
        %v208 = vld [vmem:[%s198] sm:%s207]
        %v209 = vunpack.c.l.bf16 %v208
        %v210 = vunpack.c.h.bf16 %v208
        %v211 = vlaneseq
        %v212 = vand.u32 %v211, 127
        %vm214 = vcmp.lt.s32.totalorder %v212, 64
        %v215 = vsel %vm214, %v209, %v10
        %s216 = scalar_lea.vmem [#allocation9], 4
        %v217 = vpack.c.bf16 0.0, %v215
        %219 = vst [vmem:[%s216] sm:$0xf] %v217
        %v221 = vld [vmem:[#allocation9] sm:$0xf]
        %v222 = vld [vmem:[#allocation9 + $0x4] sm:$0xf]
        %v223 = vld [vmem:[%s0] sm:$0xf]
        %v224 = vld [vmem:[%s0 + $0x4] sm:$0xf]
        %v225 = vld [vmem:[%s0 + $0x8] sm:$0xf]
        %v226 = vld [vmem:[%s0 + $0xc] sm:$0xf]
        %v227 = vld [vmem:[%s0 + $0x10] sm:$0xf]
        %v228 = vld [vmem:[%s0 + $0x14] sm:$0xf]
        %v229 = vld [vmem:[%s0 + $0x18] sm:$0xf]
        %v230 = vld [vmem:[%s0 + $0x1c] sm:$0xf]
        %v231 = vld [vmem:[%s0 + $0x20] sm:$0xf]
        %v232 = vld [vmem:[%s0 + $0x24] sm:$0xf]
        %v233 = vld [vmem:[%s0 + $0x28] sm:$0xf]
        %v234 = vld [vmem:[%s0 + $0x2c] sm:$0xf]
        %v235 = vld [vmem:[%s0 + $0x30] sm:$0xf]
        %v236 = vld [vmem:[%s0 + $0x34] sm:$0xf]
        %v237 = vld [vmem:[%s0 + $0x38] sm:$0xf]
        %v238 = vld [vmem:[%s0 + $0x3c] sm:$0xf]
        %v239 = vld [vmem:[%s1] sm:$0x1]
        %v241 = vlaneseq
        %v242 = vshrl.u32 %v241, 7
        %v243 = vsub.s32 0, %v242
        %v244 = vrot.slane %v239, %v243
        %v248 = vunpack.c.l.b16 %v221
        %v249 = vunpack.c.l.b16 %v222
        %v250 = vpack.c.b16 %v249, %v248
        %v268 = vunpack.c.l.b16 %v223
        %v269 = vunpack.c.l.b16 %v224
        %v270 = vunpack.c.l.b16 %v225
        %v271 = vunpack.c.l.b16 %v226
        %v272 = vunpack.c.l.b16 %v227
        %v273 = vunpack.c.l.b16 %v228
        %v274 = vunpack.c.l.b16 %v229
        %v275 = vunpack.c.l.b16 %v230
        %v276 = vunpack.c.l.b16 %v231
        %v277 = vunpack.c.l.b16 %v232
        %v278 = vunpack.c.l.b16 %v233
        %v279 = vunpack.c.l.b16 %v234
        %v280 = vunpack.c.l.b16 %v235
        %v281 = vunpack.c.l.b16 %v236
        %v282 = vunpack.c.l.b16 %v237
        %v283 = vunpack.c.l.b16 %v238
        %v284 = vpack.c.b16 %v269, %v268
        %v285 = vpack.c.b16 %v271, %v270
        %v286 = vpack.c.b16 %v273, %v272
        %v287 = vpack.c.b16 %v275, %v274
        %v288 = vpack.c.b16 %v277, %v276
        %v289 = vpack.c.b16 %v279, %v278
        %v290 = vpack.c.b16 %v281, %v280
        %v291 = vpack.c.b16 %v283, %v282
        %300 = vmatprep.subr.bf16.mxu0 0
        %301 = vmatpush1.bf16.msra.mxu0 %v284
        %302 = vmatprep.subr.bf16.mxu0 0
        %303 = vmatpush1.bf16.msra.mxu0 %v285
        %304 = vmatprep.subr.bf16.mxu0 0
        %305 = vmatpush1.bf16.msra.mxu0 %v286
        %306 = vmatprep.subr.bf16.mxu0 0
        %307 = vmatpush1.bf16.msra.mxu0 %v287
        %308 = vmatprep.subr.bf16.mxu0 0
        %309 = vmatpush1.bf16.msra.mxu0 %v288
        %310 = vmatprep.subr.bf16.mxu0 0
        %311 = vmatpush1.bf16.msra.mxu0 %v289
        %312 = vmatprep.subr.bf16.mxu0 0
        %313 = vmatpush1.bf16.msra.mxu0 %v290
        %314 = vmatprep.subr.bf16.mxu0 0
        %315 = vmatpush1.bf16.msra.mxu0 %v291
        %316 = vmatprep.subr.bf16.mxu0 0
        %317 = vmatpush1.bf16.msra.mxu0 0
        %318 = vmatprep.subr.bf16.mxu0 0
        %319 = vmatpush1.bf16.msra.mxu0 0
        %320 = vmatprep.subr.bf16.mxu0 0
        %321 = vmatpush1.bf16.msra.mxu0 0
        %322 = vmatprep.subr.bf16.mxu0 0
        %323 = vmatpush1.bf16.msra.mxu0 0
        %324 = vmatprep.subr.bf16.mxu0 0
        %325 = vmatpush1.bf16.msra.mxu0 0
        %326 = vmatprep.subr.bf16.mxu0 0
        %327 = vmatpush1.bf16.msra.mxu0 0
        %328 = vmatprep.subr.bf16.mxu0 0
        %329 = vmatpush1.bf16.msra.mxu0 0
        %330 = vmatprep.subr.bf16.mxu0 0
        %331 = vmatpush1.bf16.msra.mxu0 0
        %332 = vmatprep.mubr.bf16.mxu0 0
        %333 = vmatmul.mubr.bf16.gmra.mrb[0].mxu0 %v250
        %v334 = vpop.f32.mrb[0].mxu0
        %v335 = vadd.f32 %v244, %v334
        %v336 = vpop.f32.mrb[0].mxu0
        %v337 = vpop.f32.mrb[0].mxu0
        %v338 = vadd.f32 %v244, %v337
        %v339 = vpop.f32.mrb[0].mxu0
        %340 = vdwg.mxu0
        %v341 = vpack.c.bf16 %v338, %v335
        %v343 = vunpack.c.l.b16 %v341
        %v344 = vunpack.c.h.b16 %v341
        %v345 = vpack.c.b16 %v343, %v343
        %v346 = vpack.c.b16 %v344, %v344
        %349 = vst [vmem:[%s170] sm:$0xf] %v345
        %350 = vst [vmem:[%s170 + $0x4] sm:$0xf] %v346
        %s351 = sand.u32 %s99, 1
        %s352 = scalar_lea.sflag [#allocation8], %s351
        %s353 = sand.u32 %s99, 1
        %s354 = smul.addr %s353, 8
        %s355 = scalar_lea.vmem [#allocation7], %s354
        // Predicated region
        $region33: #{_lambda_.2} parent=31 // pred_check
          %p356 = pneg %p109
        $region34: #{_lambda_.2} parent=31 // pred_check_branch
          %358 = sbr.rel (%p356) target = $region36
        $region35: #{_lambda_.2} parent=31 // pred_region
          %s359 = smul.u32 2, %s23
          %s361 = ssub.s32 128, 128
          %362 = vsyncadd %s352, %s361
          %s363 = smul.addr %s359, 64
          %s364 = scalar_lea.hbm %s4, %s363
          %s365 = sshll.u32 %s355, 4
          %s366 = int_to_ptr.vmem [resolvable:$true] %s365
          %371 = dma.vmem_to_hbm [thread:$0]  %s366, 128, %s364, %s352, 64, 64, 4
        $region36: #{_lambda_.2} parent=31 // pred_fallthru
          _
      $region32: #{_lambda_.2} parent=5 // pred_fallthru
        _
      %p372 = scmp.le.s32.totalorder 2, %s18
      // Predicated region
      $region37: #{_lambda_.2} parent=5 // pred_check
        %p373 = pneg %p372
      $region38: #{_lambda_.2} parent=5 // pred_check_branch
        %375 = sbr.rel (%p373) target = $region40
      $region39: #{_lambda_.2} parent=5 // pred_region
        %s376 = ssub.s32 %s18, 2
        // Predicated region
        $region41: #{_lambda_.2} parent=39 // pred_check
          %p377 = pneg %p115
        $region42: #{_lambda_.2} parent=39 // pred_check_branch
          %379 = sbr.rel (%p377) target = $region44
        $region43: #{_lambda_.2} parent=39 // pred_region
          %s380 = sand.u32 %s100, 1
          %s381 = scalar_lea.sflag [#allocation8], %s380
          %s382 = sand.u32 %s100, 1
          %s383 = smul.addr %s382, 8
          %s384 = scalar_lea.vmem [#allocation7], %s383
          %385 = dma.done %s381, 128
        $region44: #{_lambda_.2} parent=39 // pred_fallthru
          _
      $region40: #{_lambda_.2} parent=5 // pred_fallthru
        _
    $region6: #{_lambda_.2} parent=1 // loop_footer
      %s22 = sadd.s32 1, %s18
    $region7: #{_lambda_.2} parent=1 // loop_footer_branch
      %17 = sbr.rel target = $region3
    $region8: #{_lambda_.2} parent=1 // loop_exit
      _
    %386 = vsyncpa [#allocation8], 1
    %s387 = scalar_lea.sflag [#allocation8], 1
    %388 = vsyncpa %s387, 1

</llo_original>
